<compile_context>
chip_gen: v6e
topology: v6e:2x2x1
jax: 0.10.0
libtpu: 0.0.40
codegen_flags: <defaults>
</compile_context>

<pallas_src>
import jax
import jax.numpy as jnp
from jax import lax
from jax.experimental import pallas as pl
from jax.experimental.pallas import tpu as pltpu

EPS = 1e-6


def _decoder_norm_kernel(alpha_ref, bias_ref, x_ref, o_ref):
    # x_ref block: (TM, D) rows in VMEM; alpha/bias: (1,) scalars in SMEM.
    x = x_ref[...].astype(jnp.float32)
    d = x.shape[-1]
    # torch.std(dim=-1) uses Bessel's correction (divide by N-1).
    # NOTE: requires D > 1 (torch.std over a single element is NaN anyway).
    inv_dm1 = 1.0 / float(d - 1)

    mean = jnp.mean(x, axis=-1, keepdims=True)
    diff = x - mean
    var_unbiased = jnp.sum(diff * diff, axis=-1, keepdims=True) * inv_dm1

    # rsqrt lowers to a single EUP op (otherwise-idle bundle slot); fold alpha
    # into the per-row scale so the per-element work is one multiply-add.
    scale = alpha_ref[0] * lax.rsqrt(var_unbiased + EPS)     # (TM, 1)
    o_ref[...] = (diff * scale + bias_ref[0]).astype(o_ref.dtype)


def _round_up(n, m):
    return ((n + m - 1) // m) * m


def _choose_row_tile(n_rows, d, itemsize):
    """Pick a row-tile size: VMEM-budgeted, sublane-aligned, not over-padded."""
    # Sublane packing: 8 rows per f32 vreg, 16 for bf16, 32 for int8/fp8.
    row_align = max(8, 32 // max(1, itemsize))
    budget_bytes = 4 * 1024 * 1024          # ~4 MiB per live buffer
    tm = budget_bytes // max(1, d * itemsize)
    tm = max(row_align, (tm // row_align) * row_align)
    tm = min(tm, 1024)                      # diminishing returns past ~1K rows
    # Never tile wider than the (row-aligned) input — avoids padding tiny
    # test inputs up to a full budget-sized tile.
    tm = min(tm, _round_up(n_rows, row_align))
    return tm


def decoder_forward(x, encoder_output, src_mask, tgt_mask, alpha, bias):
    """Pallas equivalent of Decoder.forward.

    x:              (B, S, D) float32 (bf16 also supported)
    encoder_output: (B, S_src, D)  -- unused because `layers` is empty/identity
    src_mask, tgt_mask: attention masks -- unused for the same reason
    alpha, bias:    (1,) scalar LayerNormalization parameters
    """
    # TODO(synk): `self.layers` is an externally injected nn.ModuleList (and the
    # reference __init__ has `self.layers - layers`, a bug); no concrete layer
    # definition is available, so the layer stack is treated as identity.
    del encoder_output, src_mask, tgt_mask

    B, S, D = x.shape
    n_rows = B * S
    x2 = x.reshape(n_rows, D)

    itemsize = jnp.dtype(x.dtype).itemsize
    tm = _choose_row_tile(n_rows, D, itemsize)

    # Pad the row axis up to a multiple of the tile (per-row op → padding rows
    # are independent garbage and sliced off afterwards; zero rows give
    # var=0 → rsqrt(eps), no NaNs).
    padded_rows = _round_up(n_rows, tm)
    if padded_rows != n_rows:
        x2 = jnp.pad(x2, ((0, padded_rows - n_rows), (0, 0)))

    grid = (padded_rows // tm,)

    out2 = pl.pallas_call(
        _decoder_norm_kernel,
        out_shape=jax.ShapeDtypeStruct((padded_rows, D), x.dtype),
        grid=grid,
        in_specs=[
            pl.BlockSpec(memory_space=pltpu.SMEM),           # alpha (1,)
            pl.BlockSpec(memory_space=pltpu.SMEM),           # bias  (1,)
            pl.BlockSpec((tm, D), lambda i: (i, 0)),         # x row tile
        ],
        out_specs=pl.BlockSpec((tm, D), lambda i: (i, 0)),
        compiler_params=pltpu.CompilerParams(
            dimension_semantics=("parallel",),               # shards rows over TCs on v7x
            vmem_limit_bytes=32 * 1024 * 1024,               # safe on v5e/v6e/v7x
        ),
    )(alpha, bias, x2)

    if padded_rows != n_rows:
        out2 = out2[:n_rows]
    return out2.reshape(B, S, D)


def _reference(x, alpha, bias):
    mean = jnp.mean(x, axis=-1, keepdims=True)
    var = jnp.var(x, axis=-1, keepdims=True, ddof=1)  # unbiased, like torch.std
    return alpha[0] * (x - mean) / jnp.sqrt(var + EPS) + bias[0]


if __name__ == "__main__":
    key = jax.random.PRNGKey(0)
    B, S, D = 2, 8, 32
    k1, k2 = jax.random.split(key)
    x = jax.random.normal(k1, (B, S, D), dtype=jnp.float32)
    encoder_output = jax.random.normal(k2, (B, S, D), dtype=jnp.float32)
    src_mask = jnp.ones((B, 1, 1, S), dtype=jnp.float32)
    tgt_mask = jnp.ones((B, 1, S, S), dtype=jnp.float32)

    # Deterministic parameter init, matching nn.Parameter(torch.ones(1)/zeros(1)).
    alpha = jnp.ones((1,), dtype=jnp.float32)
    bias = jnp.zeros((1,), dtype=jnp.float32)

    out = decoder_forward(x, encoder_output, src_mask, tgt_mask, alpha, bias)
    out = jax.block_until_ready(out)

    ref = _reference(x, alpha, bias)
    assert out.shape == (B, S, D)
    assert jnp.allclose(out, ref, atol=1e-5, rtol=1e-5)
    print("KERNEL_OK")
</pallas_src>

<mosaic_0001>
module attributes {stable_mosaic.version = 11 : i64} {
  func.func @_decoder_norm_kernel(%arg0: i32, %arg1: memref<1xf32, #tpu.memory_space<smem>>, %arg2: memref<1xf32, #tpu.memory_space<smem>>, %arg3: memref<16x32xf32, #tpu.memory_space<vmem>>, %arg4: memref<16x32xf32, #tpu.memory_space<vmem>>) attributes {dimension_semantics = [#tpu.dimension_semantics<parallel>], iteration_bounds = array<i64: 1>, scalar_prefetch = 0 : i64, scratch_operands = 0 : i64, tpu.core_type = #tpu.core_type<tc>, window_params = [{transform_indices = @transform_0, window_bounds = array<i64: 1>}, {transform_indices = @transform_1, window_bounds = array<i64: 1>}, {transform_indices = @transform_2, window_bounds = array<i64: 16, 32>}, {transform_indices = @transform_3, window_bounds = array<i64: 16, 32>}]} {
    %c0 = arith.constant 0 : index
    %c0_0 = arith.constant 0 : index
    %0 = vector.load %arg3[%c0, %c0_0] : memref<16x32xf32, #tpu.memory_space<vmem>>, vector<16x32xf32>
    %cst = arith.constant dense<0.000000e+00> : vector<16xf32>
    %1 = vector.multi_reduction <add>, %0, %cst [1] : vector<16x32xf32> to vector<16xf32>
    %2 = vector.shape_cast %1 : vector<16xf32> to vector<16x1xf32>
    %cst_1 = arith.constant 3.200000e+01 : f32
    %3 = vector.broadcast %cst_1 : f32 to vector<16x1xf32>
    %4 = arith.divf %2, %3 : vector<16x1xf32>
    %5 = vector.broadcast %4 : vector<16x1xf32> to vector<16x32xf32>
    %6 = arith.subf %0, %5 : vector<16x32xf32>
    %7 = arith.mulf %6, %6 : vector<16x32xf32>
    %cst_2 = arith.constant dense<0.000000e+00> : vector<16xf32>
    %8 = vector.multi_reduction <add>, %7, %cst_2 [1] : vector<16x32xf32> to vector<16xf32>
    %9 = vector.shape_cast %8 : vector<16xf32> to vector<16x1xf32>
    %cst_3 = arith.constant 0.0322580636 : f32
    %10 = vector.broadcast %cst_3 : f32 to vector<16x1xf32>
    %11 = arith.mulf %9, %10 : vector<16x1xf32>
    %c0_4 = arith.constant 0 : index
    %12 = memref.load %arg1[%c0_4] : memref<1xf32, #tpu.memory_space<smem>>
    %cst_5 = arith.constant 9.99999997E-7 : f32
    %13 = vector.broadcast %cst_5 : f32 to vector<16x1xf32>
    %14 = arith.addf %11, %13 : vector<16x1xf32>
    %15 = math.rsqrt %14 : vector<16x1xf32>
    %16 = vector.broadcast %12 : f32 to vector<16x1xf32>
    %17 = arith.mulf %16, %15 : vector<16x1xf32>
    %18 = vector.broadcast %17 : vector<16x1xf32> to vector<16x32xf32>
    %19 = arith.mulf %6, %18 : vector<16x32xf32>
    %c0_6 = arith.constant 0 : index
    %20 = memref.load %arg2[%c0_6] : memref<1xf32, #tpu.memory_space<smem>>
    %21 = vector.broadcast %20 : f32 to vector<16x32xf32>
    %22 = arith.addf %19, %21 : vector<16x32xf32>
    %c0_7 = arith.constant 0 : index
    %c0_8 = arith.constant 0 : index
    %23 = vector.load %arg4[%c0_7, %c0_8] : memref<16x32xf32, #tpu.memory_space<vmem>>, vector<16x32xf32>
    tpu.vector_store %arg4[%c0_7, %c0_8], %22 {strides = array<i32>} : memref<16x32xf32, #tpu.memory_space<vmem>>, vector<16x32xf32>,
    return
  }
  func.func @transform_0(%arg0: i32) -> i32 {
    %c0_i32 = arith.constant 0 : i32
    %c0_i32_0 = arith.constant 0 : i32
    return %c0_i32 : i32
  }
  func.func @transform_1(%arg0: i32) -> i32 {
    %c0_i32 = arith.constant 0 : i32
    %c0_i32_0 = arith.constant 0 : i32
    return %c0_i32 : i32
  }
  func.func @transform_2(%arg0: i32) -> (i32, i32) {
    %c0_i32 = arith.constant 0 : i32
    %c0_i32_0 = arith.constant 0 : i32
    return %arg0, %c0_i32 : i32, i32
  }
  func.func @transform_3(%arg0: i32) -> (i32, i32) {
    %c0_i32 = arith.constant 0 : i32
    %c0_i32_0 = arith.constant 0 : i32
    return %arg0, %c0_i32 : i32, i32
  }
}

</mosaic_0001>

<llo_original>
// kernel: tpu_custom_call.1
$region0: #{tpu_custom_call.1}
  #allocation0 [shape = 'u32[]', space=smem, size = 0x4, offset = 0x4, fixed_abs, tag = 'smem constant byte address 0x4 - core index']
  #allocation1 [shape = 'u32[144,128]{1,0:T(1,128)}', space=vmem, size = 0x12000, scoped, tag = 'internal scratch']
  #allocation2 [shape = 'f32[1]{0:T(128)S(6)}', space=smem, size = 0x200, scoped, tag = 'scoped memory for tpu_custom_call.1']
  #allocation3 [shape = 'f32[1]{0:T(128)S(6)}', space=smem, size = 0x200, scoped, tag = 'scoped memory for tpu_custom_call.1']
  %s0 = inlined_call_operand.<no memory space> [shape: f32[1], index: 0, kind: input, shape index: {}]
  %s1 = inlined_call_operand.<no memory space> [shape: f32[1], index: 1, kind: input, shape index: {}]
  %s2 = inlined_call_operand.hbm [shape: f32[16,32], index: 2, kind: input, shape index: {}]
  %s3 = inlined_call_operand.hbm [shape: f32[16,32], index: 3, kind: output, shape index: {}]
  %s4 = sld [smem:[#allocation0]]
  $region26: #{tpu_custom_call.1} parent=0
    _
  %s6 = ssub.s32 1, %s4
  %s7 = scalar_select 0, %s6, %s4
  %8 = sst [smem:[#allocation2]] %s0
  %9 = sst [smem:[#allocation3]] %s1
  $region1: #{tpu_custom_call.1} parent=0
    #allocation4 [shape = 'u8[8192]{0}', space=vmem, size = 0x2000, scoped, tag = 'input window, operand 2, single buffered']
    #allocation5 [shape = 's32[1]{0}', space=sflag, size = 0x4, scoped, tag = 'scoped memory for tpu_custom_call.1']
    #allocation6 [shape = 's32[1]{0}', space=sflag, size = 0x4, scoped, tag = 'scoped memory for tpu_custom_call.1']
    #allocation7 [shape = 'u8[8192]{0}', space=vmem, size = 0x2000, scoped, tag = 'output window, operand 0, single buffered']
    %10 = vsyncpa [#allocation5], 0
    %11 = vsyncpa [#allocation6], 0
    // Predicated region
    $region2: #{tpu_custom_call.1} parent=1 // pred_check
      _
    $region3: #{tpu_custom_call.1} parent=1 // pred_check_branch
      %13 = sbr.rel (0) target = $region5
    $region4: #{tpu_custom_call.1} parent=1 // pred_region
      _
    $region5: #{tpu_custom_call.1} parent=1 // pred_fallthru
      _
    // Predicated region
    $region6: #{tpu_custom_call.1} parent=1 // pred_check
      _
    $region7: #{tpu_custom_call.1} parent=1 // pred_check_branch
      %15 = sbr.rel (0) target = $region9
    $region8: #{tpu_custom_call.1} parent=1 // pred_region
      _
    $region9: #{tpu_custom_call.1} parent=1 // pred_fallthru
      _
    // Predicated region
    $region10: #{tpu_custom_call.1} parent=1 // pred_check
      _
    $region11: #{tpu_custom_call.1} parent=1 // pred_check_branch
      %17 = sbr.rel (0) target = $region13
    $region12: #{tpu_custom_call.1} parent=1 // pred_region
      %s19 = ssub.s32 256, 256
      %20 = vsyncadd [#allocation5], %s19
      %s21 = sshll.u32 [#allocation4], 4
      %s22 = int_to_ptr.vmem [resolvable:$true] %s21
      %27 = dma.hbm_to_vmem [thread:$0]  %s2, 256, %s22, [#allocation5], 128, 128, 8
    $region13: #{tpu_custom_call.1} parent=1 // pred_fallthru
      _
    // Predicated region
    $region14: #{tpu_custom_call.1} parent=1 // pred_check
      _
    $region15: #{tpu_custom_call.1} parent=1 // pred_check_branch
      %29 = sbr.rel (0) target = $region17
    $region16: #{tpu_custom_call.1} parent=1 // pred_region
      %30 = dma.done [#allocation5], 256
    $region17: #{tpu_custom_call.1} parent=1 // pred_fallthru
      _
    %v31 = vld [vmem:[#allocation4] sm:$0xff]
    %v32 = vld [vmem:[#allocation4 + $0x8] sm:$0xff]
    %vm33 = vcmask 261120
    %v34 = vsel %vm33, %v31, 0.0
    %35 = vadd.xlane.f32.xlu0 %v34
    %v36 = vpop.xlane.xlu0 %35
    %v37 = vsel %vm33, %v32, 0.0
    %38 = vadd.xlane.f32.xlu0 %v37
    %v39 = vpop.xlane.xlu0 %38
    %v40 = vrcp.pop 32.0
    %v41 = vmul.f32 %v36, %v40
    %v42 = vmul.f32 %v39, %v40
    %v43 = vsub.f32 %v31, %v41
    %v44 = vsub.f32 %v32, %v42
    %v45 = vmul.f32 %v43, %v43
    %v46 = vmul.f32 %v44, %v44
    %v47 = vsel %vm33, %v45, 0.0
    %48 = vadd.xlane.f32.xlu0 %v47
    %v49 = vpop.xlane.xlu0 %48
    %v50 = vsel %vm33, %v46, 0.0
    %51 = vadd.xlane.f32.xlu0 %v50
    %v52 = vpop.xlane.xlu0 %51
    %v53 = vmul.f32 %v49, 0.032258064
    %v54 = vmul.f32 %v52, 0.032258064
    %s55 = sld [smem:[#allocation2]]
    %v56 = vadd.f32 %v53, 1e-06
    %v57 = vadd.f32 %v54, 1e-06
    %v58 = vrsqrt.pop %v56
    %v59 = vrsqrt.pop %v57
    %v60 = vstv %s55
    %v61 = vmul.f32 %v60, %v58
    %v62 = vmul.f32 %v60, %v59
    %v63 = vmul.f32 %v43, %v61
    %v64 = vmul.f32 %v44, %v62
    %s65 = sld [smem:[#allocation3]]
    %v66 = vstv %s65
    %v67 = vadd.f32 %v63, %v66
    %v68 = vadd.f32 %v64, %v66
    %69 = vst.msk [vmem:[#allocation7] sm:$0xff] %vm33, %v67
    %70 = vst.msk [vmem:[#allocation7 + $0x8] sm:$0xff] %vm33, %v68
    // Predicated region
    $region18: #{tpu_custom_call.1} parent=1 // pred_check
      _
    $region19: #{tpu_custom_call.1} parent=1 // pred_check_branch
      %72 = sbr.rel (0) target = $region21
    $region20: #{tpu_custom_call.1} parent=1 // pred_region
      %s74 = ssub.s32 256, 256
      %75 = vsyncadd [#allocation6], %s74
      %s76 = sshll.u32 [#allocation7], 4
      %s77 = int_to_ptr.vmem [resolvable:$true] %s76
      %82 = dma.vmem_to_hbm [thread:$0]  %s77, 256, %s3, [#allocation6], 128, 128, 8
    $region21: #{tpu_custom_call.1} parent=1 // pred_fallthru
      _
    // Predicated region
    $region22: #{tpu_custom_call.1} parent=1 // pred_check
      _
    $region23: #{tpu_custom_call.1} parent=1 // pred_check_branch
      %84 = sbr.rel (0) target = $region25
    $region24: #{tpu_custom_call.1} parent=1 // pred_region
      %85 = dma.done [#allocation6], 256
    $region25: #{tpu_custom_call.1} parent=1 // pred_fallthru
      _
    %86 = vsyncpa [#allocation5], 1
    %87 = vsyncpa [#allocation6], 1

</llo_original>
